<compile_context>
chip_gen: v6e
topology: v6e:2x2x1
jax: 0.10.0
libtpu: 0.0.40
codegen_flags: <defaults>
</compile_context>

<pallas_src>
import jax
import jax.numpy as jnp
from jax import lax
from jax.experimental import pallas as pl
from jax.experimental.pallas import tpu as pltpu


def _index_select_dim2_kernel(idx_ref, x_ref, o_ref):
    # idx_ref: SMEM scalar-prefetch ref, shape (n_idx,), int32
    # x_ref:   VMEM full block, shape (d0, d1, D)      -- gather axis on lanes
    # o_ref:   VMEM full block, shape (d0, d1, n_idx)
    d0, d1, D = x_ref.shape
    n_idx = o_ref.shape[-1]

    x = x_ref[...]                                           # one vector load
    lane_id = lax.broadcasted_iota(jnp.int32, (d0, d1, D), 2)

    cols = []
    for j in range(n_idx):                                   # static, fully unrolled (n_idx = 2)
        # NOTE: jnp.clip silently clamps out-of-range indices, whereas
        # torch.index_select raises -- intentional semantic deviation.
        idx = jnp.clip(idx_ref[j], 0, D - 1)
        sel = jnp.where(lane_id == idx, x, 0.0)
        cols.append(jnp.sum(sel, axis=2, keepdims=True))     # (d0, d1, 1) lane reduce

    # Assemble in registers and issue a single store.
    o_ref[...] = jnp.concatenate(cols, axis=2).astype(o_ref.dtype)


def index_select_dim2(x, indices):
    """torch.index_select(x, 2, indices) for x:[d0,d1,D] float32, indices:[n] int."""
    d0, d1, D = x.shape
    n_idx = indices.shape[0]

    # TODO(synk): torch uses int64 indices; TPU SMEM scalars are 32-bit, so cast
    # (harmless at D=6; add an explicit range check if this kernel is generalized).
    idx32 = indices.astype(jnp.int32)

    itemsize = jnp.dtype(x.dtype).itemsize
    bytes_accessed = (d0 * d1 * D) * itemsize + (d0 * d1 * n_idx) * itemsize + n_idx * 4

    return pl.pallas_call(
        _index_select_dim2_kernel,
        out_shape=jax.ShapeDtypeStruct((d0, d1, n_idx), x.dtype),
        grid_spec=pltpu.PrefetchScalarGridSpec(
            num_scalar_prefetch=1,
            grid=(1,),
            # Full-array blocks (block shape == array shape): no (8,128) divisibility
            # issues at this tiny size, one DMA each way, single pipeline step.
            in_specs=[
                pl.BlockSpec((d0, d1, D), lambda i, idx: (0, 0, 0),
                             pipeline_mode=pl.Buffered(1)),
            ],
            out_specs=pl.BlockSpec((d0, d1, n_idx), lambda i, idx: (0, 0, 0),
                                   pipeline_mode=pl.Buffered(1)),
        ),
        compiler_params=pltpu.CompilerParams(
            dimension_semantics=("arbitrary",),
        ),
        cost_estimate=pl.CostEstimate(
            flops=0, transcendentals=0, bytes_accessed=bytes_accessed),
    )(idx32, x)


if __name__ == "__main__":
    key = jax.random.PRNGKey(0)
    kx, ki = jax.random.split(key)
    x = jax.random.normal(kx, (4, 5, 6), dtype=jnp.float32)
    indices = jax.random.randint(ki, (2,), 0, 6, dtype=jnp.int32)

    out = jax.block_until_ready(index_select_dim2(x, indices))

    ref = jnp.take(x, indices, axis=2)
    assert out.shape == (4, 5, 2), out.shape
    assert jnp.allclose(out, ref), "mismatch vs reference index_select"
    print("KERNEL_OK")
</pallas_src>

<mosaic_0001>
module attributes {stable_mosaic.version = 11 : i64} {
  func.func @_index_select_dim2_kernel(%arg0: i32, %arg1: memref<2xi32, #tpu.memory_space<smem>>, %arg2: memref<4x5x6xf32, #tpu.memory_space<vmem>>, %arg3: memref<4x5x2xf32, #tpu.memory_space<vmem>>) attributes {dimension_semantics = [#tpu.dimension_semantics<arbitrary>], iteration_bounds = array<i64: 1>, scalar_prefetch = 1 : i64, scratch_operands = 0 : i64, tpu.core_type = #tpu.core_type<tc>, window_params = [{pipeline_mode = #tpu.pipeline_mode<synchronous>, transform_indices = @transform_0, window_bounds = array<i64: 4, 5, 6>}, {pipeline_mode = #tpu.pipeline_mode<synchronous>, transform_indices = @transform_1, window_bounds = array<i64: 4, 5, 2>}]} {
    %c0 = arith.constant 0 : index
    %c0_0 = arith.constant 0 : index
    %c0_1 = arith.constant 0 : index
    %0 = vector.load %arg2[%c0, %c0_0, %c0_1] : memref<4x5x6xf32, #tpu.memory_space<vmem>>, vector<4x5x6xf32>
    %1 = tpu.iota {dimensions = array<i32: 2>} : vector<4x5x6xi32>
    %c0_2 = arith.constant 0 : index
    %2 = memref.load %arg1[%c0_2] : memref<2xi32, #tpu.memory_space<smem>>
    %c0_i32 = arith.constant 0 : i32
    %c5_i32 = arith.constant 5 : i32
    %3 = arith.maxsi %c0_i32, %2 : i32
    %4 = arith.minsi %c5_i32, %3 : i32
    %5 = vector.broadcast %4 : i32 to vector<4x5x6xi32>
    %6 = arith.cmpi eq, %1, %5 : vector<4x5x6xi32>
    %cst = arith.constant 0.000000e+00 : f32
    %7 = vector.broadcast %cst : f32 to vector<4x5x6xf32>
    %8 = arith.select %6, %0, %7 : vector<4x5x6xi1>, vector<4x5x6xf32>
    %cst_3 = arith.constant dense<0.000000e+00> : vector<4x5xf32>
    %9 = vector.multi_reduction <add>, %8, %cst_3 [2] : vector<4x5x6xf32> to vector<4x5xf32>
    %10 = vector.shape_cast %9 : vector<4x5xf32> to vector<4x5x1xf32>
    %c1 = arith.constant 1 : index
    %11 = memref.load %arg1[%c1] : memref<2xi32, #tpu.memory_space<smem>>
    %c0_i32_4 = arith.constant 0 : i32
    %c5_i32_5 = arith.constant 5 : i32
    %12 = arith.maxsi %c0_i32_4, %11 : i32
    %13 = arith.minsi %c5_i32_5, %12 : i32
    %14 = vector.broadcast %13 : i32 to vector<4x5x6xi32>
    %15 = arith.cmpi eq, %1, %14 : vector<4x5x6xi32>
    %cst_6 = arith.constant 0.000000e+00 : f32
    %16 = vector.broadcast %cst_6 : f32 to vector<4x5x6xf32>
    %17 = arith.select %15, %0, %16 : vector<4x5x6xi1>, vector<4x5x6xf32>
    %cst_7 = arith.constant dense<0.000000e+00> : vector<4x5xf32>
    %18 = vector.multi_reduction <add>, %17, %cst_7 [2] : vector<4x5x6xf32> to vector<4x5xf32>
    %19 = vector.shape_cast %18 : vector<4x5xf32> to vector<4x5x1xf32>
    %20 = tpu.concatenate %10, %19 in 2 : vector<4x5x1xf32>, vector<4x5x1xf32> -> vector<4x5x2xf32>
    %c0_8 = arith.constant 0 : index
    %c0_9 = arith.constant 0 : index
    %c0_10 = arith.constant 0 : index
    %21 = vector.load %arg3[%c0_8, %c0_9, %c0_10] : memref<4x5x2xf32, #tpu.memory_space<vmem>>, vector<4x5x2xf32>
    tpu.vector_store %arg3[%c0_8, %c0_9, %c0_10], %20 {strides = array<i32>} : memref<4x5x2xf32, #tpu.memory_space<vmem>>, vector<4x5x2xf32>,
    return
  }
  func.func @transform_0(%arg0: i32, %arg1: memref<2xi32, #tpu.memory_space<smem>>) -> (i32, i32, i32) {
    %c0_i32 = arith.constant 0 : i32
    %c0_i32_0 = arith.constant 0 : i32
    %c0_i32_1 = arith.constant 0 : i32
    %c0_i32_2 = arith.constant 0 : i32
    return %c0_i32, %c0_i32_0, %c0_i32_1 : i32, i32, i32
  }
  func.func @transform_1(%arg0: i32, %arg1: memref<2xi32, #tpu.memory_space<smem>>) -> (i32, i32, i32) {
    %c0_i32 = arith.constant 0 : i32
    %c0_i32_0 = arith.constant 0 : i32
    %c0_i32_1 = arith.constant 0 : i32
    %c0_i32_2 = arith.constant 0 : i32
    return %c0_i32, %c0_i32_0, %c0_i32_1 : i32, i32, i32
  }
}

</mosaic_0001>

<llo_original>
// kernel: tpu_custom_call.1
$region0: #{tpu_custom_call.1}
  #allocation0 [shape = 'u32[]', space=smem, size = 0x4, offset = 0x4, fixed_abs, tag = 'smem constant byte address 0x4 - core index']
  #allocation1 [shape = 'u32[144,128]{1,0:T(1,128)}', space=vmem, size = 0x12000, scoped, tag = 'internal scratch']
  #allocation2 [shape = 's32[1]{0}', space=sflag, size = 0x4, scoped, tag = 'scoped memory for tpu_custom_call.1']
  #allocation3 [shape = 'u8[512]{0}', space=smem, size = 0x200, scoped, tag = 'prefetched SMEM operand 0']
  %s0 = inlined_call_operand.vmem [shape: s32[2], index: 0, kind: input, shape index: {}]
  %s1 = inlined_call_operand.vmem [shape: f32[4,5,6], index: 1, kind: input, shape index: {}]
  %s2 = inlined_call_operand.vmem [shape: f32[4,5,2], index: 2, kind: output, shape index: {}]
  %s3 = sld [smem:[#allocation0]]
  $region14: #{tpu_custom_call.1} parent=0
    _
  %s5 = ssub.s32 1, %s3
  %s6 = scalar_select 0, %s5, %s3
  %s7 = sshll.u32 %s0, 4
  %s8 = int_to_ptr.vmem [resolvable:$true] %s7
  %10 = dma.vmem_to_smem %s8, 16, [#allocation3], [#allocation2]
  %11 = dma.done [#allocation2], 16
  %12 = sfence
  // Predicated region
  $region2: #{tpu_custom_call.1} parent=0 // pred_check
    _
  $region3: #{tpu_custom_call.1} parent=0 // pred_check_branch
    %14 = sbr.rel (0) target = $region5
  $region4: #{tpu_custom_call.1} parent=0 // pred_region
    _
  $region5: #{tpu_custom_call.1} parent=0 // pred_fallthru
    _
  %v15 = vld [vmem:[%s1] sm:$0x1f]
  %v16 = vld [vmem:[%s1 + $0x8] sm:$0x1f]
  %v17 = vld [vmem:[%s1 + $0x10] sm:$0x1f]
  %v18 = vld [vmem:[%s1 + $0x18] sm:$0x1f]
  %v19 = vlaneseq
  %v20 = vand.u32 %v19, 127
  %s21 = sld [smem:[#allocation3]]
  %p22 = scmp.gt.s32.totalorder %s21, 0
  %s23 = scalar_select %p22, %s21, 0
  %p24 = scmp.lt.s32.totalorder %s23, 5
  %s25 = scalar_select %p24, %s23, 5
  %v26 = vstv %s25
  %vm27 = vcmp.eq.s32.totalorder %v20, %v26
  %v28 = vsel %vm27, %v15, 0.0
  %v29 = vsel %vm27, %v16, 0.0
  %v30 = vsel %vm27, %v17, 0.0
  %v31 = vsel %vm27, %v18, 0.0
  %vm32 = vcmask 45056
  %v33 = vsel %vm32, %v28, 0.0
  %34 = vadd.xlane.f32.xlu0 %v33
  %v35 = vpop.xlane.xlu0 %34
  %v36 = vsel %vm32, %v29, 0.0
  %37 = vadd.xlane.f32.xlu0 %v36
  %v38 = vpop.xlane.xlu0 %37
  %v39 = vsel %vm32, %v30, 0.0
  %40 = vadd.xlane.f32.xlu0 %v39
  %v41 = vpop.xlane.xlu0 %40
  %v42 = vsel %vm32, %v31, 0.0
  %43 = vadd.xlane.f32.xlu0 %v42
  %v44 = vpop.xlane.xlu0 %43
  %s45 = sld [smem:[#allocation3 + $0x1]]
  %p46 = scmp.gt.s32.totalorder %s45, 0
  %s47 = scalar_select %p46, %s45, 0
  %p48 = scmp.lt.s32.totalorder %s47, 5
  %s49 = scalar_select %p48, %s47, 5
  %v50 = vstv %s49
  %vm51 = vcmp.eq.s32.totalorder %v20, %v50
  %v52 = vsel %vm51, %v15, 0.0
  %v53 = vsel %vm51, %v16, 0.0
  %v54 = vsel %vm51, %v17, 0.0
  %v55 = vsel %vm51, %v18, 0.0
  %v56 = vsel %vm32, %v52, 0.0
  %57 = vadd.xlane.f32.xlu0 %v56
  %v58 = vpop.xlane.xlu0 %57
  %v59 = vsel %vm32, %v53, 0.0
  %60 = vadd.xlane.f32.xlu0 %v59
  %v61 = vpop.xlane.xlu0 %60
  %v62 = vsel %vm32, %v54, 0.0
  %63 = vadd.xlane.f32.xlu0 %v62
  %v64 = vpop.xlane.xlu0 %63
  %v65 = vsel %vm32, %v55, 0.0
  %66 = vadd.xlane.f32.xlu0 %v65
  %v67 = vpop.xlane.xlu0 %66
  %vm68 = vcmask 7168
  %v69 = vsel %vm68, %v35, %v58
  %v70 = vsel %vm68, %v38, %v61
  %v71 = vsel %vm68, %v41, %v64
  %v72 = vsel %vm68, %v44, %v67
  %vm73 = vcmask 12288
  %74 = vst.msk [vmem:[%s2] sm:$0x1f] %vm73, %v69
  %75 = vst.msk [vmem:[%s2 + $0x8] sm:$0x1f] %vm73, %v70
  %76 = vst.msk [vmem:[%s2 + $0x10] sm:$0x1f] %vm73, %v71
  %77 = vst.msk [vmem:[%s2 + $0x18] sm:$0x1f] %vm73, %v72
  // Predicated region
  $region6: #{tpu_custom_call.1} parent=0 // pred_check
    _
  $region7: #{tpu_custom_call.1} parent=0 // pred_check_branch
    %79 = sbr.rel (0) target = $region9
  $region8: #{tpu_custom_call.1} parent=0 // pred_region
    _
  $region9: #{tpu_custom_call.1} parent=0 // pred_fallthru
    _
  // Predicated region
  $region10: #{tpu_custom_call.1} parent=0 // pred_check
    _
  $region11: #{tpu_custom_call.1} parent=0 // pred_check_branch
    %81 = sbr.rel (0) target = $region13
  $region12: #{tpu_custom_call.1} parent=0 // pred_region
    _
  $region13: #{tpu_custom_call.1} parent=0 // pred_fallthru
    _

</llo_original>
